<compile_context>
chip_gen: v7x
topology: tpu7x:2x2x1
jax: 0.10.0
libtpu: 0.0.40
codegen_flags: <defaults>
</compile_context>

<pallas_src>
import functools

import jax
import jax.numpy as jnp
from jax.experimental import pallas as pl
from jax.experimental.pallas import tpu as pltpu


def _decomp_kernel(x_ref, res_ref, mean_ref, *, kernel_size: int, C: int):
    """x_ref / res_ref / mean_ref: (bblk, N) VMEM tiles with N = L*C."""
    _, N = x_ref.shape
    pad = (kernel_size - 1) // 2

    x = x_ref[...].astype(jnp.float32)

    # Edge-replicated copy (register value): [x[:, :C]]*pad ++ x ++ [x[:, -C:]]*pad.
    if pad > 0:
        first_c = x[:, :C]
        last_c = x[:, N - C:]
        xp = jnp.concatenate([first_c] * pad + [x] + [last_c] * pad, axis=1)
    else:
        xp = x

    # O(log k) windowed sum via a shift-doubling ladder on the padded copy.
    # ladder has window length m; acc accumulates taps [0, off) of the k-window.
    # All shifts are static lane slices; the shrinking widths keep every read
    # inside the padded buffer, so no masking / wrap handling is needed.
    width = N                  # output width (== N by construction)
    acc = None
    ladder = xp
    m = 1
    off = 0
    rem = kernel_size
    while True:
        if rem & 1:
            term = ladder[:, off * C: off * C + width]
            acc = term if acc is None else acc + term
            off += m
        rem >>= 1
        if rem == 0:
            break
        w = ladder.shape[1]
        ladder = ladder[:, : w - m * C] + ladder[:, m * C:]
        m *= 2

    mean = acc * (1.0 / kernel_size)
    mean_ref[...] = mean.astype(mean_ref.dtype)
    res_ref[...] = (x - mean).astype(res_ref.dtype)


def _pick_batch_block(B: int, N: int, Np: int, itemsize: int) -> int:
    """Rows per block, sized from the *padded* f32 working set."""
    # Live f32 temporaries inside the kernel (x, xp, two ladder terms, acc, slack).
    per_row_compute = 6 * Np * 4
    # Double-buffered pipeline buffers for 1 input + 2 output streams.
    per_row_io = 2 * 3 * N * itemsize
    per_row = per_row_compute + per_row_io
    budget = 16 * 1024 * 1024
    bblk = max(1, budget // per_row)
    if bblk >= B:
        return B                      # full batch in one block (full-extent dim OK)
    return max(8, (bblk // 8) * 8)    # keep the sublane dim a multiple of 8


def series_decomp(x: jax.Array, kernel_size: int):
    """x: (B, L, C). Returns (res, moving_mean), each (B, L, C)."""
    if kernel_size < 1 or kernel_size % 2 != 1:
        raise ValueError("series_decomp requires an odd kernel_size >= 1 "
                         "(as used by Autoformer/PowerMamba).")
    B, L, C = x.shape
    N = L * C
    pad = (kernel_size - 1) // 2
    Np = N + 2 * pad * C
    itemsize = jnp.dtype(x.dtype).itemsize

    x_flat = x.reshape(B, N)          # free, contiguous reshape (lane-dense layout)
    bblk = _pick_batch_block(B, N, Np, itemsize)
    grid = (pl.cdiv(B, bblk),)

    block = pl.BlockSpec((bblk, N), lambda b: (b, 0))
    kernel = functools.partial(_decomp_kernel, kernel_size=kernel_size, C=C)

    n_adds = max(kernel_size.bit_length() - 1, 0) + bin(kernel_size).count("1")
    res, mean = pl.pallas_call(
        kernel,
        out_shape=(
            jax.ShapeDtypeStruct((B, N), x.dtype),
            jax.ShapeDtypeStruct((B, N), x.dtype),
        ),
        grid=grid,
        in_specs=[block],
        out_specs=(block, block),
        compiler_params=pltpu.CompilerParams(
            dimension_semantics=("parallel",),
            vmem_limit_bytes=32 * 1024 * 1024,
        ),
        cost_estimate=pl.CostEstimate(
            flops=(2 * n_adds + 3) * B * N,
            transcendentals=0,
            bytes_accessed=3 * B * N * itemsize,
        ),
    )(x_flat)
    return res.reshape(B, L, C), mean.reshape(B, L, C)


def _ref_series_decomp(x, kernel_size):
    """Pure-JAX reference matching PyTorch AvgPool1d(stride=1, padding=0)."""
    pad = (kernel_size - 1) // 2
    front = jnp.repeat(x[:, 0:1, :], pad, axis=1)
    end = jnp.repeat(x[:, -1:, :], pad, axis=1)
    xpad = jnp.concatenate([front, x, end], axis=1)
    L = x.shape[1]
    windows = jnp.stack(
        [xpad[:, j:j + L, :] for j in range(kernel_size)], axis=0)
    mean = jnp.mean(windows.astype(jnp.float32), axis=0).astype(x.dtype)
    return x - mean, mean


if __name__ == "__main__":
    key0, key1 = jax.random.split(jax.random.PRNGKey(0))

    # Case 1: small smoke test.
    B, L, C, K = 2, 16, 8, 5
    x = jax.random.normal(key0, (B, L, C), dtype=jnp.float32)
    res, mean = series_decomp(x, K)
    jax.block_until_ready((res, mean))
    res_ref, mean_ref = _ref_series_decomp(x, K)
    assert res.shape == (B, L, C) and mean.shape == (B, L, C)
    assert jnp.allclose(mean, mean_ref, atol=1e-5, rtol=1e-5)
    assert jnp.allclose(res, res_ref, atol=1e-5, rtol=1e-5)

    # Case 2: Autoformer-like config (kernel_size=25, 7 channels, unaligned L).
    B2, L2, C2, K2 = 3, 36, 7, 25
    x2 = jax.random.normal(key1, (B2, L2, C2), dtype=jnp.float32)
    res2, mean2 = series_decomp(x2, K2)
    jax.block_until_ready((res2, mean2))
    res2_ref, mean2_ref = _ref_series_decomp(x2, K2)
    assert jnp.allclose(mean2, mean2_ref, atol=1e-5, rtol=1e-5)
    assert jnp.allclose(res2, res2_ref, atol=1e-5, rtol=1e-5)

    print("KERNEL_OK")
</pallas_src>

<mosaic_0001>
module attributes {stable_mosaic.version = 11 : i64} {
  func.func @_decomp_kernel(%arg0: i32, %arg1: memref<2x128xf32, #tpu.memory_space<vmem>>, %arg2: memref<2x128xf32, #tpu.memory_space<vmem>>, %arg3: memref<2x128xf32, #tpu.memory_space<vmem>>) attributes {dimension_semantics = [#tpu.dimension_semantics<parallel>], iteration_bounds = array<i64: 1>, scalar_prefetch = 0 : i64, scratch_operands = 0 : i64, tpu.core_type = #tpu.core_type<tc>, window_params = [{transform_indices = @transform_0, window_bounds = array<i64: 2, 128>}, {transform_indices = @transform_1, window_bounds = array<i64: 2, 128>}, {transform_indices = @transform_2, window_bounds = array<i64: 2, 128>}]} {
    %c0 = arith.constant 0 : index
    %c0_0 = arith.constant 0 : index
    %0 = vector.load %arg1[%c0, %c0_0] : memref<2x128xf32, #tpu.memory_space<vmem>>, vector<2x128xf32>
    %1 = vector.extract_strided_slice %0 {offsets = [0, 0], sizes = [2, 8], strides = [1, 1]} : vector<2x128xf32> to vector<2x8xf32>
    %2 = vector.extract_strided_slice %0 {offsets = [0, 120], sizes = [2, 8], strides = [1, 1]} : vector<2x128xf32> to vector<2x8xf32>
    %3 = tpu.concatenate %1, %1, %0, %2, %2 in 1 : vector<2x8xf32>, vector<2x8xf32>, vector<2x128xf32>, vector<2x8xf32>, vector<2x8xf32> -> vector<2x160xf32>
    %4 = vector.extract_strided_slice %3 {offsets = [0, 0], sizes = [2, 128], strides = [1, 1]} : vector<2x160xf32> to vector<2x128xf32>
    %5 = vector.extract_strided_slice %3 {offsets = [0, 0], sizes = [2, 152], strides = [1, 1]} : vector<2x160xf32> to vector<2x152xf32>
    %6 = vector.extract_strided_slice %3 {offsets = [0, 8], sizes = [2, 152], strides = [1, 1]} : vector<2x160xf32> to vector<2x152xf32>
    %7 = arith.addf %5, %6 : vector<2x152xf32>
    %8 = vector.extract_strided_slice %7 {offsets = [0, 0], sizes = [2, 136], strides = [1, 1]} : vector<2x152xf32> to vector<2x136xf32>
    %9 = vector.extract_strided_slice %7 {offsets = [0, 16], sizes = [2, 136], strides = [1, 1]} : vector<2x152xf32> to vector<2x136xf32>
    %10 = arith.addf %8, %9 : vector<2x136xf32>
    %11 = vector.extract_strided_slice %10 {offsets = [0, 8], sizes = [2, 128], strides = [1, 1]} : vector<2x136xf32> to vector<2x128xf32>
    %12 = arith.addf %4, %11 : vector<2x128xf32>
    %cst = arith.constant 2.000000e-01 : f32
    %13 = vector.broadcast %cst : f32 to vector<2x128xf32>
    %14 = arith.mulf %12, %13 : vector<2x128xf32>
    %c0_1 = arith.constant 0 : index
    %c0_2 = arith.constant 0 : index
    %15 = vector.load %arg3[%c0_1, %c0_2] : memref<2x128xf32, #tpu.memory_space<vmem>>, vector<2x128xf32>
    tpu.vector_store %arg3[%c0_1, %c0_2], %14 {strides = array<i32>} : memref<2x128xf32, #tpu.memory_space<vmem>>, vector<2x128xf32>,
    %16 = arith.subf %0, %14 : vector<2x128xf32>
    %c0_3 = arith.constant 0 : index
    %c0_4 = arith.constant 0 : index
    %17 = vector.load %arg2[%c0_3, %c0_4] : memref<2x128xf32, #tpu.memory_space<vmem>>, vector<2x128xf32>
    tpu.vector_store %arg2[%c0_3, %c0_4], %16 {strides = array<i32>} : memref<2x128xf32, #tpu.memory_space<vmem>>, vector<2x128xf32>,
    return
  }
  func.func @transform_0(%arg0: i32) -> (i32, i32) {
    %c0_i32 = arith.constant 0 : i32
    %c0_i32_0 = arith.constant 0 : i32
    return %arg0, %c0_i32 : i32, i32
  }
  func.func @transform_1(%arg0: i32) -> (i32, i32) {
    %c0_i32 = arith.constant 0 : i32
    %c0_i32_0 = arith.constant 0 : i32
    return %arg0, %c0_i32 : i32, i32
  }
  func.func @transform_2(%arg0: i32) -> (i32, i32) {
    %c0_i32 = arith.constant 0 : i32
    %c0_i32_0 = arith.constant 0 : i32
    return %arg0, %c0_i32 : i32, i32
  }
}

</mosaic_0001>

<llo_original>
// kernel: tpu_custom_call.1
$region0: #{tpu_custom_call.1}
  #allocation0 [shape = 'u32[]', space=smem, size = 0x4, offset = 0x4, fixed_abs, tag = 'smem constant byte address 0x4 - core index']
  #allocation1 [shape = 'u32[144,128]{1,0:T(1,128)}', space=vmem, size = 0x12000, scoped, tag = 'internal scratch']
  %s0 = inlined_call_operand.hbm [shape: f32[2,128], index: 0, kind: input, shape index: {}]
  %s1 = inlined_call_operand.hbm [shape: f32[2,128], index: 1, kind: output, shape index: {0}]
  %s2 = inlined_call_operand.hbm [shape: f32[2,128], index: 2, kind: output, shape index: {1}]
  %3 = xla_tuple %s1, %s2
  %s4 = sld [smem:[#allocation0]]
  $region26: #{tpu_custom_call.1} parent=0
    _
  %s6 = ssub.s32 1, %s4
  %s7 = scalar_select 0, %s6, %s4
  $region1: #{tpu_custom_call.1} parent=0
    #allocation2 [shape = 'u8[1024]{0}', space=vmem, size = 0x400, scoped, tag = 'input window, operand 0, single buffered']
    #allocation3 [shape = 's32[1]{0}', space=sflag, size = 0x4, scoped, tag = 'scoped memory for tpu_custom_call.1']
    #allocation4 [shape = 's32[1]{0}', space=sflag, size = 0x4, scoped, tag = 'scoped memory for tpu_custom_call.1']
    #allocation5 [shape = 'u8[1024]{0}', space=vmem, size = 0x400, scoped, tag = 'output window, operand 0, single buffered']
    #allocation6 [shape = 'u8[1024]{0}', space=vmem, size = 0x400, scoped, tag = 'output window, operand 1, single buffered']
    #allocation7 [shape = 's32[1]{0}', space=sflag, size = 0x4, scoped, tag = 'scoped memory for tpu_custom_call.1']
    %8 = vsyncpa [#allocation3], 0
    %9 = vsyncpa [#allocation4], 0
    %10 = vsyncpa [#allocation7], 0
    // Predicated region
    $region2: #{tpu_custom_call.1} parent=1 // pred_check
      _
    $region3: #{tpu_custom_call.1} parent=1 // pred_check_branch
      %12 = sbr.rel (0) target = $region5
    $region4: #{tpu_custom_call.1} parent=1 // pred_region
      %s14 = ssub.s32 32, 32
      %15 = vsyncadd [#allocation3], %s14
      %s17 = sshll.u32 [#allocation2], 4
      %s18 = int_to_ptr.vmem [resolvable:$true] %s17
      %20 = dma.hbm_to_vmem [thread:$0]  %s0, 32, %s18, [#allocation3]
    $region5: #{tpu_custom_call.1} parent=1 // pred_fallthru
      _
    // Predicated region
    $region6: #{tpu_custom_call.1} parent=1 // pred_check
      _
    $region7: #{tpu_custom_call.1} parent=1 // pred_check_branch
      %22 = sbr.rel (0) target = $region9
    $region8: #{tpu_custom_call.1} parent=1 // pred_region
      %23 = dma.done [#allocation3], 32
    $region9: #{tpu_custom_call.1} parent=1 // pred_fallthru
      _
    %v24 = vld [vmem:[#allocation2] sm:$0x3]
    %26 = vrot.lane.b32.xlu0 %v24, 8
    %v27 = vpop.permute.xlu0 %26
    %29 = vrot.lane.b32.xlu0 %v24, 16
    %v30 = vpop.permute.xlu0 %29
    %32 = vrot.lane.b32.xlu0 %v24, 24
    %v33 = vpop.permute.xlu0 %32
    %35 = vrot.lane.b32.xlu0 %v24, 32
    %v36 = vpop.permute.xlu0 %35
    %vm38 = vcmask 64512
    %v39 = vsel %vm38, %v24, %v27
    %vm40 = vcmask 130048
    %v41 = vsel %vm40, %v39, %v30
    %v42 = vsel %vm40, %v30, %v33
    %vm43 = vcmask 195584
    %v44 = vsel %vm43, %v42, %v36
    %47 = vrot.lane.b32.xlu0 %v41, 120
    %v48 = vpop.permute.xlu0 %47
    %49 = vrot.lane.b32.xlu0 %v44, 120
    %v50 = vpop.permute.xlu0 %49
    %vm51 = vcmask 982016
    %v52 = vsel %vm51, %v48, %v50
    %v55 = vadd.f32 %v41, %v52
    %v56 = vadd.f32 %v44, %v50
    %59 = vrot.lane.b32.xlu0 %v55, 112
    %v60 = vpop.permute.xlu0 %59
    %61 = vrot.lane.b32.xlu0 %v56, 112
    %v62 = vpop.permute.xlu0 %61
    %vm63 = vcmask 916480
    %v64 = vsel %vm63, %v60, %v62
    %v67 = vadd.f32 %v55, %v64
    %v68 = vadd.f32 %v56, %v62
    %71 = vrot.lane.b32.xlu0 %v67, 120
    %v72 = vpop.permute.xlu0 %71
    %73 = vrot.lane.b32.xlu0 %v68, 120
    %v74 = vpop.permute.xlu0 %73
    %v75 = vsel %vm51, %v72, %v74
    %v77 = vadd.f32 %v41, %v75
    %v78 = vmul.f32 %v77, 0.2
    %79 = vst [vmem:[#allocation6] sm:$0x3] %v78
    %v80 = vsub.f32 %v24, %v78
    %81 = vst [vmem:[#allocation5] sm:$0x3] %v80
    // Predicated region
    $region10: #{tpu_custom_call.1} parent=1 // pred_check
      _
    $region11: #{tpu_custom_call.1} parent=1 // pred_check_branch
      %83 = sbr.rel (0) target = $region13
    $region12: #{tpu_custom_call.1} parent=1 // pred_region
      %s85 = ssub.s32 32, 32
      %86 = vsyncadd [#allocation4], %s85
      %s88 = sshll.u32 [#allocation5], 4
      %s89 = int_to_ptr.vmem [resolvable:$true] %s88
      %91 = dma.vmem_to_hbm [thread:$0]  %s89, 32, %s1, [#allocation4]
    $region13: #{tpu_custom_call.1} parent=1 // pred_fallthru
      _
    // Predicated region
    $region14: #{tpu_custom_call.1} parent=1 // pred_check
      _
    $region15: #{tpu_custom_call.1} parent=1 // pred_check_branch
      %93 = sbr.rel (0) target = $region17
    $region16: #{tpu_custom_call.1} parent=1 // pred_region
      %s95 = ssub.s32 32, 32
      %96 = vsyncadd [#allocation7], %s95
      %s98 = sshll.u32 [#allocation6], 4
      %s99 = int_to_ptr.vmem [resolvable:$true] %s98
      %101 = dma.vmem_to_hbm [thread:$0]  %s99, 32, %s2, [#allocation7]
    $region17: #{tpu_custom_call.1} parent=1 // pred_fallthru
      _
    // Predicated region
    $region18: #{tpu_custom_call.1} parent=1 // pred_check
      _
    $region19: #{tpu_custom_call.1} parent=1 // pred_check_branch
      %103 = sbr.rel (0) target = $region21
    $region20: #{tpu_custom_call.1} parent=1 // pred_region
      %104 = dma.done [#allocation4], 32
    $region21: #{tpu_custom_call.1} parent=1 // pred_fallthru
      _
    // Predicated region
    $region22: #{tpu_custom_call.1} parent=1 // pred_check
      _
    $region23: #{tpu_custom_call.1} parent=1 // pred_check_branch
      %106 = sbr.rel (0) target = $region25
    $region24: #{tpu_custom_call.1} parent=1 // pred_region
      %107 = dma.done [#allocation7], 32
    $region25: #{tpu_custom_call.1} parent=1 // pred_fallthru
      _
    %108 = vsyncpa [#allocation3], 1
    %109 = vsyncpa [#allocation4], 1
    %110 = vsyncpa [#allocation7], 1

</llo_original>
